<compile_context>
chip_gen: v6e
topology: v6e:2x2x1
jax: 0.10.0
libtpu: 0.0.40
codegen_flags: <defaults>
</compile_context>

<pallas_src>
import jax
import jax.numpy as jnp
from jax.experimental import pallas as pl
from jax.experimental.pallas import tpu as pltpu


# ---------------------------------------------------------------------------
# Kernel
# ---------------------------------------------------------------------------
def _make_dwt_kernel(w, wc):
    """Kernel for input row width `w` (row pair is 2*w wide) and chunk width `wc`
    (wc divides w, wc even)."""
    n_chunks = w // wc
    w2c = wc // 2

    def dot3(v_f32, t_bf16):
        # f32 LHS as three exact bf16 terms -> 3 MXU passes, f32 accumulation.
        # RHS entries are 0/±0.5 (exact in bf16), so max rel. error ~2^-24.
        hi = v_f32.astype(jnp.bfloat16)
        r1 = v_f32 - hi.astype(jnp.float32)
        mid = r1.astype(jnp.bfloat16)
        lo = (r1 - mid.astype(jnp.float32)).astype(jnp.bfloat16)
        acc = jnp.dot(hi, t_bf16, preferred_element_type=jnp.float32)
        acc = acc + jnp.dot(mid, t_bf16, preferred_element_type=jnp.float32)
        acc = acc + jnp.dot(lo, t_bf16, preferred_element_type=jnp.float32)
        return acc

    def kernel(t_ref, x_ref, o_ref):
        # t_ref: (wc, wc) bf16, fused [T_sum | T_dif], VMEM-resident across steps.
        # x_ref: (1, tile_m, 2*w)    -- [even input row | odd input row] per row.
        # o_ref: (1, 4, tile_m, w/2) -- bands LL, HL, LH, HH.
        t = t_ref[...]
        for c in range(n_chunks):            # static (unrolled) chunk loop
            c0 = c * wc
            # TODO(synk): when W is not a multiple of 128 the odd-row slice below is
            # not lane-aligned and costs a relayout copy (only matters for small W).
            even = x_ref[0, :, c0:c0 + wc].astype(jnp.float32)
            odd = x_ref[0, :, w + c0:w + c0 + wc].astype(jnp.float32)
            s = even + odd                    # row-sum  (VPU)
            d = odd - even                    # row-diff (VPU)
            rs = dot3(s, t)                   # [LL | HL] chunk, (tile_m, wc) f32
            rd = dot3(d, t)                   # [LH | HH] chunk
            o0 = c * w2c
            o_ref[0, 0, :, o0:o0 + w2c] = rs[:, :w2c].astype(o_ref.dtype)   # LL
            o_ref[0, 1, :, o0:o0 + w2c] = rs[:, w2c:].astype(o_ref.dtype)   # HL
            o_ref[0, 2, :, o0:o0 + w2c] = rd[:, :w2c].astype(o_ref.dtype)   # LH
            o_ref[0, 3, :, o0:o0 + w2c] = rd[:, w2c:].astype(o_ref.dtype)   # HH

    return kernel


# ---------------------------------------------------------------------------
# Tiling / tuning helpers
# ---------------------------------------------------------------------------
def _device_kind():
    try:
        return jax.devices()[0].device_kind.lower()
    except Exception:  # pragma: no cover - defensive
        return ""


def _tpu_tuning():
    """(max chunk width, VMEM block budget, vmem_limit_bytes), generation-aware."""
    kind = _device_kind()
    if any(v in kind for v in ("v2", "v3", "v4", "v5")):
        return 128, 40 * 2**20, 64 * 2**20      # 128-wide MXU, 128 MiB VMEM
    if "v6" in kind:
        return 256, 40 * 2**20, 64 * 2**20      # 256-wide MXU, 128 MiB VMEM
    return 256, 20 * 2**20, 32 * 2**20          # v7x (64 MiB VMEM/TC) / unknown


def _pick_chunk_width(w, max_wc):
    """Even divisor of w, <= max_wc, preferring lane-aligned 256/128."""
    if w <= max_wc:
        return w
    for cand in (max_wc, 128):
        if cand <= max_wc and w % cand == 0:
            return cand
    best = max((c for c in range(2, max_wc + 1, 2) if w % c == 0), default=w)
    return best if best >= 32 else w            # degenerate divisors: dense fallback


def _divisors(n):
    out = []
    i = 1
    while i * i <= n:
        if n % i == 0:
            out.append(i)
            if i != n // i:
                out.append(n // i)
        i += 1
    return out


def _pick_tile_m(m2, n_batch, row_bytes, budget_bytes, sublane):
    """Row tile: divides m2, multiple of `sublane` (or == m2), fits the VMEM budget,
    and (best effort) keeps total grid steps even and >= 4 for v7x megacore balance."""
    cands = sorted(t for t in _divisors(m2) if t % sublane == 0 or t == m2)
    if not cands:
        cands = [m2]
    fitting = [t for t in cands if t * row_bytes <= budget_bytes]
    if not fitting:
        fitting = [cands[0]]                    # smallest legal tile, never the whole axis

    def steps(t):
        return n_batch * (m2 // t)

    for pred in (lambda t: steps(t) % 2 == 0 and steps(t) >= 4,
                 lambda t: steps(t) % 2 == 0,
                 lambda t: True):
        ok = [t for t in fitting if pred(t)]
        if ok:
            return max(ok)
    return max(fitting)


# ---------------------------------------------------------------------------
# Wrapper
# ---------------------------------------------------------------------------
def dwt_forward(x):
    """x: (N, C, H, W) float32 or bfloat16 -> (N, 4C, H/2, W/2), same dtype."""
    N, C, H, W = x.shape
    assert H % 2 == 0 and W % 2 == 0, "H and W must be even"
    itemsize = x.dtype.itemsize
    assert itemsize in (2, 4), "expected float32 or bfloat16 input"
    H2, W2 = H // 2, W // 2
    M2 = C * H2

    max_wc, block_budget, vmem_limit = _tpu_tuning()
    Wc = _pick_chunk_width(W, max_wc)
    Wc2 = Wc // 2

    # Fused column-combine matrix [T_sum | T_dif]; entries 0/±0.5 (exact in bf16).
    eye2 = jnp.repeat(jnp.eye(Wc2, dtype=jnp.float32), 2, axis=0)        # (Wc, Wc2)
    sign = jnp.tile(jnp.array([-1.0, 1.0], jnp.float32), Wc2)[:, None]   # (Wc, 1)
    t_both = (0.5 * jnp.concatenate([eye2, eye2 * sign], axis=1)).astype(jnp.bfloat16)

    # Metadata-only view: each row = [even input row | odd input row].
    x_rows = x.reshape(N, M2, 2 * W)

    # VMEM accounting per tile row: double-buffered input (2*2W) + output (2*4*W2)
    # blocks + in-kernel f32/bf16 temporaries (s, d, 3-way splits, partial results).
    row_bytes = 8 * W * itemsize + 48 * Wc
    t_bytes = 2 * Wc * Wc * 2                    # T is double-buffered by the pipeline
    budget = max(8 * row_bytes, block_budget - t_bytes - (1 << 20))
    sublane = 16 if itemsize == 2 else 8
    tile_m = _pick_tile_m(M2, N, row_bytes, budget, sublane)
    assert M2 % tile_m == 0

    grid = (N, M2 // tile_m)
    kernel = _make_dwt_kernel(W, Wc)

    cost = pl.CostEstimate(
        flops=int(N * M2 * W * (4 + 12 * Wc)),   # VPU butterfly + 3-pass chunk matmuls
        transcendentals=0,
        bytes_accessed=int(2 * x.size * itemsize))

    out = pl.pallas_call(
        kernel,
        out_shape=jax.ShapeDtypeStruct((N, 4, M2, W2), x.dtype),
        grid_spec=pltpu.PrefetchScalarGridSpec(
            num_scalar_prefetch=0,
            grid=grid,
            in_specs=[
                pl.BlockSpec((Wc, Wc), lambda n, i: (0, 0)),              # T (resident)
                pl.BlockSpec((1, tile_m, 2 * W), lambda n, i: (n, i, 0)),
            ],
            out_specs=pl.BlockSpec((1, 4, tile_m, W2), lambda n, i: (n, 0, i, 0)),
        ),
        compiler_params=pltpu.CompilerParams(
            dimension_semantics=("parallel", "parallel"),
            vmem_limit_bytes=vmem_limit,
        ),
        cost_estimate=cost,
    )(t_both, x_rows)

    # (N, 4, C*H2, W2) -> (N, 4C, H2, W2) is a pure metadata reshape (band-major,
    # matching torch.cat((LL, HL, LH, HH), dim=1)).
    return out.reshape(N, 4 * C, H2, W2)


def dwt_reference(x):
    """Pure-JAX reference mirroring the PyTorch code exactly."""
    x01 = x[:, :, 0::2, :] / 2
    x02 = x[:, :, 1::2, :] / 2
    x1 = x01[:, :, :, 0::2]
    x2 = x02[:, :, :, 0::2]
    x3 = x01[:, :, :, 1::2]
    x4 = x02[:, :, :, 1::2]
    x_LL = x1 + x2 + x3 + x4
    x_HL = -x1 - x2 + x3 + x4
    x_LH = -x1 + x2 - x3 + x4
    x_HH = x1 - x2 - x3 + x4
    return jnp.concatenate((x_LL, x_HL, x_LH, x_HH), axis=1)


if __name__ == "__main__":
    key = jax.random.PRNGKey(0)
    x = jax.random.normal(key, (2, 4, 16, 16), dtype=jnp.float32)

    out = jax.block_until_ready(jax.jit(dwt_forward)(x))
    ref = dwt_reference(x)

    assert out.shape == (2, 16, 8, 8), out.shape
    err = float(jnp.max(jnp.abs(out - ref)))
    assert jnp.allclose(out, ref, atol=1e-5, rtol=1e-5), f"max abs err {err}"
    print("KERNEL_OK")
</pallas_src>

<mosaic_0001>
module attributes {stable_mosaic.version = 11 : i64} {
  func.func @kernel(%arg0: i32, %arg1: i32, %arg2: memref<16x16xbf16, #tpu.memory_space<vmem>>, %arg3: memref<1x16x32xf32, #tpu.memory_space<vmem>>, %arg4: memref<1x4x16x8xf32, #tpu.memory_space<vmem>>) attributes {dimension_semantics = [#tpu.dimension_semantics<parallel>, #tpu.dimension_semantics<parallel>], iteration_bounds = array<i64: 2, 2>, scalar_prefetch = 0 : i64, scratch_operands = 0 : i64, tpu.core_type = #tpu.core_type<tc>, window_params = [{pipeline_mode = #tpu.pipeline_mode<synchronous>, transform_indices = @transform_0, window_bounds = array<i64: 16, 16>}, {transform_indices = @transform_1, window_bounds = array<i64: 1, 16, 32>}, {transform_indices = @transform_2, window_bounds = array<i64: 1, 4, 16, 8>}]} {
    %c0 = arith.constant 0 : index
    %c0_0 = arith.constant 0 : index
    %0 = vector.load %arg2[%c0, %c0_0] : memref<16x16xbf16, #tpu.memory_space<vmem>>, vector<16x16xbf16>
    %c0_1 = arith.constant 0 : index
    %c0_2 = arith.constant 0 : index
    %c0_3 = arith.constant 0 : index
    %1 = vector.load %arg3[%c0_1, %c0_2, %c0_3] : memref<1x16x32xf32, #tpu.memory_space<vmem>>, vector<1x16x16xf32>
    %2 = vector.shape_cast %1 : vector<1x16x16xf32> to vector<16x16xf32>
    %c0_4 = arith.constant 0 : index
    %c0_5 = arith.constant 0 : index
    %c16 = arith.constant 16 : index
    %3 = vector.load %arg3[%c0_4, %c0_5, %c16] : memref<1x16x32xf32, #tpu.memory_space<vmem>>, vector<1x16x16xf32>
    %4 = vector.shape_cast %3 : vector<1x16x16xf32> to vector<16x16xf32>
    %5 = arith.addf %2, %4 : vector<16x16xf32>
    %6 = arith.subf %4, %2 : vector<16x16xf32>
    %7 = arith.truncf %5 : vector<16x16xf32> to vector<16x16xbf16>
    %8 = arith.extf %7 : vector<16x16xbf16> to vector<16x16xf32>
    %9 = arith.subf %5, %8 : vector<16x16xf32>
    %10 = arith.truncf %9 : vector<16x16xf32> to vector<16x16xbf16>
    %11 = arith.extf %10 : vector<16x16xbf16> to vector<16x16xf32>
    %12 = arith.subf %9, %11 : vector<16x16xf32>
    %13 = arith.truncf %12 : vector<16x16xf32> to vector<16x16xbf16>
    %cst = arith.constant dense<0.000000e+00> : vector<16x16xf32>
    %14 = tpu.matmul %7, %0, %cst {dimension_numbers = #tpu.dot_dimension_numbers<[1], [0], [0], [1], [0, 0, 1, 1], [], []>} : vector<16x16xbf16>, vector<16x16xbf16>, vector<16x16xf32> -> vector<16x16xf32>
    %cst_6 = arith.constant dense<0.000000e+00> : vector<16x16xf32>
    %15 = tpu.matmul %10, %0, %cst_6 {dimension_numbers = #tpu.dot_dimension_numbers<[1], [0], [0], [1], [0, 0, 1, 1], [], []>} : vector<16x16xbf16>, vector<16x16xbf16>, vector<16x16xf32> -> vector<16x16xf32>
    %16 = arith.addf %14, %15 : vector<16x16xf32>
    %cst_7 = arith.constant dense<0.000000e+00> : vector<16x16xf32>
    %17 = tpu.matmul %13, %0, %cst_7 {dimension_numbers = #tpu.dot_dimension_numbers<[1], [0], [0], [1], [0, 0, 1, 1], [], []>} : vector<16x16xbf16>, vector<16x16xbf16>, vector<16x16xf32> -> vector<16x16xf32>
    %18 = arith.addf %16, %17 : vector<16x16xf32>
    %19 = arith.truncf %6 : vector<16x16xf32> to vector<16x16xbf16>
    %20 = arith.extf %19 : vector<16x16xbf16> to vector<16x16xf32>
    %21 = arith.subf %6, %20 : vector<16x16xf32>
    %22 = arith.truncf %21 : vector<16x16xf32> to vector<16x16xbf16>
    %23 = arith.extf %22 : vector<16x16xbf16> to vector<16x16xf32>
    %24 = arith.subf %21, %23 : vector<16x16xf32>
    %25 = arith.truncf %24 : vector<16x16xf32> to vector<16x16xbf16>
    %cst_8 = arith.constant dense<0.000000e+00> : vector<16x16xf32>
    %26 = tpu.matmul %19, %0, %cst_8 {dimension_numbers = #tpu.dot_dimension_numbers<[1], [0], [0], [1], [0, 0, 1, 1], [], []>} : vector<16x16xbf16>, vector<16x16xbf16>, vector<16x16xf32> -> vector<16x16xf32>
    %cst_9 = arith.constant dense<0.000000e+00> : vector<16x16xf32>
    %27 = tpu.matmul %22, %0, %cst_9 {dimension_numbers = #tpu.dot_dimension_numbers<[1], [0], [0], [1], [0, 0, 1, 1], [], []>} : vector<16x16xbf16>, vector<16x16xbf16>, vector<16x16xf32> -> vector<16x16xf32>
    %28 = arith.addf %26, %27 : vector<16x16xf32>
    %cst_10 = arith.constant dense<0.000000e+00> : vector<16x16xf32>
    %29 = tpu.matmul %25, %0, %cst_10 {dimension_numbers = #tpu.dot_dimension_numbers<[1], [0], [0], [1], [0, 0, 1, 1], [], []>} : vector<16x16xbf16>, vector<16x16xbf16>, vector<16x16xf32> -> vector<16x16xf32>
    %30 = arith.addf %28, %29 : vector<16x16xf32>
    %31 = vector.extract_strided_slice %18 {offsets = [0, 0], sizes = [16, 8], strides = [1, 1]} : vector<16x16xf32> to vector<16x8xf32>
    %c0_11 = arith.constant 0 : index
    %c0_12 = arith.constant 0 : index
    %c0_13 = arith.constant 0 : index
    %c0_14 = arith.constant 0 : index
    %32 = vector.load %arg4[%c0_11, %c0_12, %c0_13, %c0_14] : memref<1x4x16x8xf32, #tpu.memory_space<vmem>>, vector<1x1x16x8xf32>
    %33 = vector.shape_cast %32 : vector<1x1x16x8xf32> to vector<16x8xf32>
    %34 = vector.shape_cast %31 : vector<16x8xf32> to vector<1x1x16x8xf32>
    tpu.vector_store %arg4[%c0_11, %c0_12, %c0_13, %c0_14], %34 {strides = array<i32>} : memref<1x4x16x8xf32, #tpu.memory_space<vmem>>, vector<1x1x16x8xf32>,
    %35 = vector.extract_strided_slice %18 {offsets = [0, 8], sizes = [16, 8], strides = [1, 1]} : vector<16x16xf32> to vector<16x8xf32>
    %c0_15 = arith.constant 0 : index
    %c1 = arith.constant 1 : index
    %c0_16 = arith.constant 0 : index
    %c0_17 = arith.constant 0 : index
    %36 = vector.load %arg4[%c0_15, %c1, %c0_16, %c0_17] : memref<1x4x16x8xf32, #tpu.memory_space<vmem>>, vector<1x1x16x8xf32>
    %37 = vector.shape_cast %36 : vector<1x1x16x8xf32> to vector<16x8xf32>
    %38 = vector.shape_cast %35 : vector<16x8xf32> to vector<1x1x16x8xf32>
    tpu.vector_store %arg4[%c0_15, %c1, %c0_16, %c0_17], %38 {strides = array<i32>} : memref<1x4x16x8xf32, #tpu.memory_space<vmem>>, vector<1x1x16x8xf32>,
    %39 = vector.extract_strided_slice %30 {offsets = [0, 0], sizes = [16, 8], strides = [1, 1]} : vector<16x16xf32> to vector<16x8xf32>
    %c0_18 = arith.constant 0 : index
    %c2 = arith.constant 2 : index
    %c0_19 = arith.constant 0 : index
    %c0_20 = arith.constant 0 : index
    %40 = vector.load %arg4[%c0_18, %c2, %c0_19, %c0_20] : memref<1x4x16x8xf32, #tpu.memory_space<vmem>>, vector<1x1x16x8xf32>
    %41 = vector.shape_cast %40 : vector<1x1x16x8xf32> to vector<16x8xf32>
    %42 = vector.shape_cast %39 : vector<16x8xf32> to vector<1x1x16x8xf32>
    tpu.vector_store %arg4[%c0_18, %c2, %c0_19, %c0_20], %42 {strides = array<i32>} : memref<1x4x16x8xf32, #tpu.memory_space<vmem>>, vector<1x1x16x8xf32>,
    %43 = vector.extract_strided_slice %30 {offsets = [0, 8], sizes = [16, 8], strides = [1, 1]} : vector<16x16xf32> to vector<16x8xf32>
    %c0_21 = arith.constant 0 : index
    %c3 = arith.constant 3 : index
    %c0_22 = arith.constant 0 : index
    %c0_23 = arith.constant 0 : index
    %44 = vector.load %arg4[%c0_21, %c3, %c0_22, %c0_23] : memref<1x4x16x8xf32, #tpu.memory_space<vmem>>, vector<1x1x16x8xf32>
    %45 = vector.shape_cast %44 : vector<1x1x16x8xf32> to vector<16x8xf32>
    %46 = vector.shape_cast %43 : vector<16x8xf32> to vector<1x1x16x8xf32>
    tpu.vector_store %arg4[%c0_21, %c3, %c0_22, %c0_23], %46 {strides = array<i32>} : memref<1x4x16x8xf32, #tpu.memory_space<vmem>>, vector<1x1x16x8xf32>,
    return
  }
  func.func @transform_0(%arg0: i32, %arg1: i32) -> (i32, i32) {
    %c0_i32 = arith.constant 0 : i32
    %c0_i32_0 = arith.constant 0 : i32
    %c0_i32_1 = arith.constant 0 : i32
    return %c0_i32, %c0_i32_0 : i32, i32
  }
  func.func @transform_1(%arg0: i32, %arg1: i32) -> (i32, i32, i32) {
    %c0_i32 = arith.constant 0 : i32
    %c0_i32_0 = arith.constant 0 : i32
    return %arg0, %arg1, %c0_i32 : i32, i32, i32
  }
  func.func @transform_2(%arg0: i32, %arg1: i32) -> (i32, i32, i32, i32) {
    %c0_i32 = arith.constant 0 : i32
    %c0_i32_0 = arith.constant 0 : i32
    %c0_i32_1 = arith.constant 0 : i32
    return %arg0, %c0_i32, %arg1, %c0_i32_0 : i32, i32, i32, i32
  }
}

</mosaic_0001>

<llo_original>
// kernel: tile.6
$region0: #{tile.6}
  #allocation0 [shape = 's32[1]{0}', space=sflag, size = 0x4, scoped, tag = 'scoped memory for tile.6']
  %s0 = inlined_call_operand.vmem [shape: f32[2], index: 0, kind: input, shape index: {}]
  %s1 = inlined_call_operand.vmem [shape: f32[8,2], index: 1, kind: output, shape index: {}]
  // Predicated region
  $region2: #{tile.6} parent=0 // pred_check
    _
  $region3: #{tile.6} parent=0 // pred_check_branch
    %3 = sbr.rel (0) target = $region5
  $region4: #{tile.6} parent=0 // pred_region
    _
  $region5: #{tile.6} parent=0 // pred_fallthru
    _
  %v4 = vld [vmem:[%s0] ss:$0 sm:$0xff]
  %5 = vst [vmem:[%s1] sm:$0xff] %v4

// kernel: mul.8
$region0: #{mul.8}
  %s0 = inlined_call_operand.vmem [shape: f32[8,2], index: 0, kind: input, shape index: {}]
  %s1 = inlined_call_operand.vmem [shape: f32[16], index: 1, kind: output, shape index: {}]
  $region1: #{mul.8} parent=0
    #allocation0 [shape = 'u8[4096]{0}', space=vmem, size = 0x1000, scoped, tag = 'scoped mem for output reshape']
    %v2 = vld [vmem:[%s0] sm:$0x1]
    %vm3 = vcmask 15360
    %4 = vst.msk [vmem:[#allocation0] sm:$0x1] %vm3, %v2
    %s5 = scalar_lea.vmem %s0, 7
    %v6 = vld [vmem:[%s5] sm:$0x1]
    %7 = vrot.lane.b32.xlu0 %v6, 14
    %v8 = vpop.permute.xlu0 %7
    %vm9 = vcmask 130160
    %10 = vst.msk [vmem:[#allocation0] sm:$0x1] %vm9, %v8
    %s11 = scalar_lea.vmem %s0, 6
    %v12 = vld [vmem:[%s11] sm:$0x1]
    %13 = vrot.lane.b32.xlu0 %v12, 12
    %v14 = vpop.permute.xlu0 %13
    %vm15 = vcmask 113760
    %16 = vst.msk [vmem:[#allocation0] sm:$0x1] %vm15, %v14
    %s17 = scalar_lea.vmem %s0, 5
    %v18 = vld [vmem:[%s17] sm:$0x1]
    %19 = vrot.lane.b32.xlu0 %v18, 10
    %v20 = vpop.permute.xlu0 %19
    %vm21 = vcmask 97360
    %22 = vst.msk [vmem:[#allocation0] sm:$0x1] %vm21, %v20
    %s23 = scalar_lea.vmem %s0, 4
    %v24 = vld [vmem:[%s23] sm:$0x1]
    %25 = vrot.lane.b32.xlu0 %v24, 8
    %v26 = vpop.permute.xlu0 %25
    %vm27 = vcmask 80960
    %28 = vst.msk [vmem:[#allocation0] sm:$0x1] %vm27, %v26
    %s29 = scalar_lea.vmem %s0, 3
    %v30 = vld [vmem:[%s29] sm:$0x1]
    %31 = vrot.lane.b32.xlu0 %v30, 6
    %v32 = vpop.permute.xlu0 %31
    %vm33 = vcmask 64560
    %34 = vst.msk [vmem:[#allocation0] sm:$0x1] %vm33, %v32
    %s35 = scalar_lea.vmem %s0, 2
    %v36 = vld [vmem:[%s35] sm:$0x1]
    %37 = vrot.lane.b32.xlu0 %v36, 4
    %v38 = vpop.permute.xlu0 %37
    %vm39 = vcmask 48160
    %40 = vst.msk [vmem:[#allocation0] sm:$0x1] %vm39, %v38
    %s41 = scalar_lea.vmem %s0, 1
    %v42 = vld [vmem:[%s41] sm:$0x1]
    %43 = vrot.lane.b32.xlu0 %v42, 2
    %v44 = vpop.permute.xlu0 %43
    %vm45 = vcmask 31760
    %46 = vst.msk [vmem:[#allocation0] sm:$0x1] %vm45, %v44
    %s48 = sshll.u32 1, 1
    %s49 = ssub.s32 %s48, 1
    %v51 = vld [vmem:[#allocation0] sm:%s49]
    %s52 = sshll.u32 1, 1
    %s53 = ssub.s32 %s52, 1
    %54 = vst [vmem:[%s1] sm:%s53] %v51

// kernel: dwt_forward.1
$region0: #{dwt_forward.1}
  #allocation0 [shape = 'u32[]', space=smem, size = 0x4, offset = 0x4, fixed_abs, tag = 'smem constant byte address 0x4 - core index']
  #allocation1 [shape = 'u32[144,128]{1,0:T(1,128)}', space=vmem, size = 0x12000, scoped, tag = 'internal scratch']
  %s0 = inlined_call_operand.vmem [shape: bf16[16,16], index: 0, kind: input, shape index: {}]
  %s1 = inlined_call_operand.vmem [shape: f32[2,32,32], index: 1, kind: input, shape index: {}]
  %s2 = inlined_call_operand.vmem [shape: f32[2,4,32,8], index: 2, kind: output, shape index: {}]
  %s3 = sld [smem:[#allocation0]]
  $region75: #{dwt_forward.1} parent=0
    _
  %s5 = ssub.s32 1, %s3
  %s6 = scalar_select 0, %s5, %s3
  $region1: #{dwt_forward.1} parent=0
    #allocation2 [shape = 'u8[65536]{0}', space=vmem, size = 0x10000, scoped, tag = 'output window, operand 0']
    loop: start=0, step=1, limit=6
    $region2: #{dwt_forward.1} parent=1 // loop_pre_header
      _
    $region3: #{dwt_forward.1} parent=1 // loop_header
      %s8 = sphi 0, %s12
      %p9 = scmp.ge.s32.totalorder %s8, 6
      %s15 = sphi 0, %s27
      %s16 = sphi 0, %s23
      %s17 = sphi 0, %s15
      %s18 = sphi 0, %s16
      %s19 = sphi 0, %s17
      %s20 = sphi 0, %s18
      %s28 = sphi 0, %s28
      %s30 = sphi 0, %s28
      %s31 = sphi 0, %s30
      %s45 = sphi 0, %s31
      %s53 = sphi 0, %s55
      %s56 = sphi 0, %s53
      %s57 = sphi 0, %s56
      %s73 = sphi 0, %s57
      %s81 = sphi 0, %s83
      %s84 = sphi 0, %s81
      %s85 = sphi 0, %s84
      %s101 = sphi 0, %s85
    $region4: #{dwt_forward.1} parent=1 // loop_header_branch
      %11 = sbr.rel (%p9) target = $region8
    $region5: #{dwt_forward.1} parent=1 // loop_body
      %s13 = ssub.s32 %s8, 1
      %s14 = ssub.s32 %s8, 2
      %s21 = sadd.s32 1, %s16
      %p22 = scmp.ge.s32.totalorder %s21, 2
      %s23 = scalar_select %p22, 0, %s21
      %s24 = sadd.s32 1, %s15
      %s25 = scalar_select %p22, %s24, %s15
      %p26 = scmp.ge.s32.totalorder %s25, 2
      %s27 = scalar_select %p26, 0, %s25
      %s29 = sadd.s32 %s28, 1
      %p32 = scmp.eq.s32.totalorder %s8, 3
      %p33 = scmp.ne.s32.totalorder %s28, %s30
      %p34 = scmp.eq.s32.totalorder %s8, 0
      %p35 = por %p33, %p34
      %p36 = scmp.ne.s32.totalorder %s28, %s30
      %p37 = scmp.eq.s32.totalorder %s13, 3
      %p38 = por %p36, %p37
      %p39 = scmp.ne.s32.totalorder %s30, %s31
      %p40 = scmp.eq.s32.totalorder %s13, 0
      %p41 = por %p39, %p40
      %p42 = scmp.ne.s32.totalorder %s30, %s31
      %p43 = scmp.eq.s32.totalorder %s14, 3
      %p44 = por %p42, %p43
      %p46 = scmp.ne.s32.totalorder %s31, %s45
      %p47 = scmp.eq.s32.totalorder %s14, 0
      %p48 = por %p46, %p47
      %s49 = ssub.s32 %s15, %s27
      %s50 = ssub.s32 %s16, %s23
      %s51 = sor.u32 %s49, %s50
      %p52 = scmp.eq.s32.totalorder %s51, 0
      %s54 = sadd.s32 %s53, 1
      %s55 = scalar_select %p52, %s53, %s54
      %p58 = pneg %p52
      %p59 = scmp.eq.s32.totalorder %s8, 3
      %p60 = por %p58, %p59
      %p61 = scmp.ne.s32.totalorder %s53, %s56
      %p62 = scmp.eq.s32.totalorder %s8, 0
      %p63 = por %p61, %p62
      %p64 = scmp.ne.s32.totalorder %s53, %s56
      %p65 = scmp.eq.s32.totalorder %s13, 3
      %p66 = por %p64, %p65
      %p67 = scmp.ne.s32.totalorder %s56, %s57
      %p68 = scmp.eq.s32.totalorder %s13, 0
      %p69 = por %p67, %p68
      %p70 = scmp.ne.s32.totalorder %s56, %s57
      %p71 = scmp.eq.s32.totalorder %s14, 3
      %p72 = por %p70, %p71
      %p74 = scmp.ne.s32.totalorder %s57, %s73
      %p75 = scmp.eq.s32.totalorder %s14, 0
      %p76 = por %p74, %p75
      %s77 = ssub.s32 %s15, %s27
      %s78 = ssub.s32 %s16, %s23
      %s79 = sor.u32 %s77, %s78
      %p80 = scmp.eq.s32.totalorder %s79, 0
      %s82 = sadd.s32 %s81, 1
      %s83 = scalar_select %p80, %s81, %s82
      %p86 = pneg %p80
      %p87 = scmp.eq.s32.totalorder %s8, 3
      %p88 = por %p86, %p87
      %p89 = scmp.ne.s32.totalorder %s81, %s84
      %p90 = scmp.eq.s32.totalorder %s8, 0
      %p91 = por %p89, %p90
      %p92 = scmp.ne.s32.totalorder %s81, %s84
      %p93 = scmp.eq.s32.totalorder %s13, 3
      %p94 = por %p92, %p93
      %p95 = scmp.ne.s32.totalorder %s84, %s85
      %p96 = scmp.eq.s32.totalorder %s13, 0
      %p97 = por %p95, %p96
      %p98 = scmp.ne.s32.totalorder %s84, %s85
      %p99 = scmp.eq.s32.totalorder %s14, 3
      %p100 = por %p98, %p99
      %p102 = scmp.ne.s32.totalorder %s85, %s101
      %p103 = scmp.eq.s32.totalorder %s14, 0
      %p104 = por %p102, %p103
      %p105 = scmp.le.s32.totalorder 1, %s8
      %p106 = scmp.lt.s32.totalorder %s8, 5
      %p107 = pnand %p105, %p106
      %p108 = pneg %p107
      // Predicated region
      $region9: #{dwt_forward.1} parent=5 // pred_check
        _
      $region10: #{dwt_forward.1} parent=5 // pred_check_branch
        %110 = sbr.rel (%p107) target = $region12
      $region11: #{dwt_forward.1} parent=5 // pred_region
        %s111 = ssub.s32 %s8, 1
        // Predicated region
        $region13: #{dwt_forward.1} parent=11 // pred_check
          %p112 = pneg %p41
        $region14: #{dwt_forward.1} parent=11 // pred_check_branch
          %114 = sbr.rel (%p112) target = $region16
        $region15: #{dwt_forward.1} parent=11 // pred_region
          _
        $region16: #{dwt_forward.1} parent=11 // pred_fallthru
          _
      $region12: #{dwt_forward.1} parent=5 // pred_fallthru
        _
      %p115 = scmp.lt.s32.totalorder %s8, 4
      // Predicated region
      $region17: #{dwt_forward.1} parent=5 // pred_check
        %p116 = pneg %p115
      $region18: #{dwt_forward.1} parent=5 // pred_check_branch
        %118 = sbr.rel (%p116) target = $region20
      $region19: #{dwt_forward.1} parent=5 // pred_region
        // Predicated region
        $region21: #{dwt_forward.1} parent=19 // pred_check
          %p119 = pneg %p63
        $region22: #{dwt_forward.1} parent=19 // pred_check_branch
          %121 = sbr.rel (%p119) target = $region24
        $region23: #{dwt_forward.1} parent=19 // pred_region
          %s122 = smul.u32 2, %s16
          %p123 = scmp.lt.s32.totalorder %s15, 1
          %s124 = scalar_select %p123, %s15, 1
          %p125 = scmp.lt.s32.totalorder %s122, 3
          %s126 = scalar_select %p125, %s122, 3
          %s127 = smul.addr %s124, 4
          %s128 = sadd.s32 %s126, %s127
          %s129 = smul.addr %s128, 8
          %s130 = scalar_lea.vmem %s1, %s129
          %s131 = smul.u32 2, %s16
        $region24: #{dwt_forward.1} parent=19 // pred_fallthru
          _
      $region20: #{dwt_forward.1} parent=5 // pred_fallthru
        _
      %p132 = scmp.le.s32.totalorder 1, %s8
      %p133 = scmp.lt.s32.totalorder %s8, 5
      %p134 = pnand %p132, %p133
      %p135 = pneg %p134
      // Predicated region
      $region25: #{dwt_forward.1} parent=5 // pred_check
        _
      $region26: #{dwt_forward.1} parent=5 // pred_check_branch
        %137 = sbr.rel (%p134) target = $region28
      $region27: #{dwt_forward.1} parent=5 // pred_region
        %s138 = ssub.s32 %s8, 1
        %p139 = pneg %p41
        %p140 = pneg %p38
        %s141 = smul.u32 2, %s18
        %p142 = scmp.lt.s32.totalorder %s17, 1
        %s143 = scalar_select %p142, %s17, 1
        %p144 = scmp.lt.s32.totalorder %s141, 3
        %s145 = scalar_select %p144, %s141, 3
        %s146 = smul.addr %s143, 4
        %s147 = sadd.s32 %s145, %s146
        %s148 = smul.addr %s147, 8
        %s149 = scalar_lea.vmem %s1, %s148
        %p150 = pneg %p69
        %p151 = pneg %p66
        %p152 = pneg %p97
        %p153 = pneg %p94
        %s154 = sand.u32 %s84, 1
        %s155 = sand.u32 %s84, 1
        %s156 = smul.addr %s155, 64
        %s157 = scalar_lea.vmem [#allocation2], %s156
        %s158 = smul.u32 2, %s18
        %p159 = scmp.lt.s32.totalorder %s17, 1
        %s160 = scalar_select %p159, %s17, 1
        %p161 = scmp.lt.s32.totalorder %s158, 3
        %s162 = scalar_select %p161, %s158, 3
        %s163 = smul.addr %s160, 4
        %s164 = sadd.s32 %s162, %s163
        %s165 = smul.addr %s164, 8
        %s166 = scalar_lea.vmem %s1, %s165
        %s167 = smul.u32 2, %s18
        %s168 = smul.u32 2, %s18
        %v170 = vld [vmem:[%s0] sm:$0xf]
        %v171 = vld [vmem:[%s0 + $0x4] sm:$0xf]
        %v172 = vld [vmem:[%s166] sm:$0xff]
        %v173 = vld [vmem:[%s166 + $0x8] sm:$0xff]
        %176 = vrot.lane.b32.xlu0 %v172, 112
        %v177 = vpop.permute.xlu0 %176
        %178 = vrot.lane.b32.xlu0 %v173, 112
        %v179 = vpop.permute.xlu0 %178
        %v182 = vadd.f32 %v172, %v177
        %v183 = vadd.f32 %v173, %v179
        %184 = vrot.lane.b32.xlu0 %v172, 16
        %v185 = vpop.permute.xlu0 %184
        %186 = vrot.lane.b32.xlu0 %v173, 16
        %v187 = vpop.permute.xlu0 %186
        %v190 = vsub.f32 %v172, %v185
        %v191 = vsub.f32 %v173, %v187
        %v192 = vpack.c.bf16 %v183, %v182
        %v193 = vunpack.c.l.bf16 %v192
        %v194 = vunpack.c.h.bf16 %v192
        %v195 = vsub.f32 %v182, %v193
        %v196 = vsub.f32 %v183, %v194
        %v197 = vpack.c.bf16 %v196, %v195
        %v198 = vunpack.c.l.bf16 %v197
        %v199 = vunpack.c.h.bf16 %v197
        %v200 = vsub.f32 %v195, %v198
        %v201 = vsub.f32 %v196, %v199
        %v202 = vpack.c.bf16 %v201, %v200
        %v205 = vunpack.c.l.b16 %v170
        %v206 = vunpack.c.l.b16 %v171
        %v207 = vpack.c.b16 %v206, %v205
        %vm209 = vcmask 130048
        %v211 = vsel %vm209, %v197, 0
        %213 = vmatprep.subr.bf16.mxu0 0
        %214 = vmatpush1.bf16.msra.mxu0 0
        %215 = vmatprep.subr.bf16.mxu0 0
        %216 = vmatpush1.bf16.msra.mxu0 0
        %217 = vmatprep.subr.bf16.mxu0 0
        %218 = vmatpush1.bf16.msra.mxu0 0
        %219 = vmatprep.subr.bf16.mxu0 0
        %220 = vmatpush1.bf16.msra.mxu0 0
        %221 = vmatprep.subr.bf16.mxu0 0
        %222 = vmatpush1.bf16.msra.mxu0 0
        %223 = vmatprep.subr.bf16.mxu0 0
        %224 = vmatpush1.bf16.msra.mxu0 0
        %225 = vmatprep.subr.bf16.mxu0 0
        %226 = vmatpush1.bf16.msra.mxu0 0
        %227 = vmatprep.subr.bf16.mxu0 0
        %228 = vmatpush1.bf16.msra.mxu0 %v207
        %229 = vmatprep.subr.bf16.mxu0 0
        %230 = vmatpush2.bf16.msra.mxu0 0
        %231 = vmatprep.subr.bf16.mxu0 0
        %232 = vmatpush2.bf16.msra.mxu0 0
        %233 = vmatprep.subr.bf16.mxu0 0
        %234 = vmatpush2.bf16.msra.mxu0 0
        %235 = vmatprep.subr.bf16.mxu0 0
        %236 = vmatpush2.bf16.msra.mxu0 0
        %237 = vmatprep.subr.bf16.mxu0 0
        %238 = vmatpush2.bf16.msra.mxu0 0
        %239 = vmatprep.subr.bf16.mxu0 0
        %240 = vmatpush2.bf16.msra.mxu0 0
        %241 = vmatprep.subr.bf16.mxu0 0
        %242 = vmatpush2.bf16.msra.mxu0 0
        %243 = vmatprep.subr.bf16.mxu0 0
        %244 = vmatpush2.bf16.msra.mxu0 0
        %245 = vmatprep.mubr.bf16.mxu0 0
        %246 = vmatmul.mubr.bf16.gmra.mxu0 %v211
        %v247 = vpop.f32.mrf.mxu0
        %v248 = vadd.f32 0.0, %v247
        %v249 = vpop.f32.mrf.mxu0
        %v250 = vpop.f32.mrf.mxu0
        %v251 = vadd.f32 0.0, %v250
        %v252 = vpop.f32.mrf.mxu0
        %253 = vdwg.mxu0
        %v255 = vsel %vm209, %v192, 0
        %257 = vmatprep.subr.bf16.mxu0 0
        %258 = vmatpush1.bf16.msra.mxu0 0
        %259 = vmatprep.subr.bf16.mxu0 0
        %260 = vmatpush1.bf16.msra.mxu0 0
        %261 = vmatprep.subr.bf16.mxu0 0
        %262 = vmatpush1.bf16.msra.mxu0 0
        %263 = vmatprep.subr.bf16.mxu0 0
        %264 = vmatpush1.bf16.msra.mxu0 0
        %265 = vmatprep.subr.bf16.mxu0 0
        %266 = vmatpush1.bf16.msra.mxu0 0
        %267 = vmatprep.subr.bf16.mxu0 0
        %268 = vmatpush1.bf16.msra.mxu0 0
        %269 = vmatprep.subr.bf16.mxu0 0
        %270 = vmatpush1.bf16.msra.mxu0 0
        %271 = vmatprep.subr.bf16.mxu0 0
        %272 = vmatpush1.bf16.msra.mxu0 %v207
        %273 = vmatprep.subr.bf16.mxu0 0
        %274 = vmatpush2.bf16.msra.mxu0 0
        %275 = vmatprep.subr.bf16.mxu0 0
        %276 = vmatpush2.bf16.msra.mxu0 0
        %277 = vmatprep.subr.bf16.mxu0 0
        %278 = vmatpush2.bf16.msra.mxu0 0
        %279 = vmatprep.subr.bf16.mxu0 0
        %280 = vmatpush2.bf16.msra.mxu0 0
        %281 = vmatprep.subr.bf16.mxu0 0
        %282 = vmatpush2.bf16.msra.mxu0 0
        %283 = vmatprep.subr.bf16.mxu0 0
        %284 = vmatpush2.bf16.msra.mxu0 0
        %285 = vmatprep.subr.bf16.mxu0 0
        %286 = vmatpush2.bf16.msra.mxu0 0
        %287 = vmatprep.subr.bf16.mxu0 0
        %288 = vmatpush2.bf16.msra.mxu0 0
        %289 = vmatprep.mubr.bf16.mxu0 0
        %290 = vmatmul.mubr.bf16.gmra.mxu0 %v255
        %v291 = vpop.f32.mrf.mxu0
        %v292 = vadd.f32 %v248, %v291
        %v293 = vpop.f32.mrf.mxu0
        %v294 = vpop.f32.mrf.mxu0
        %v295 = vadd.f32 %v251, %v294
        %v296 = vpop.f32.mrf.mxu0
        %297 = vdwg.mxu0
        %v299 = vsel %vm209, %v202, 0
        %301 = vmatprep.subr.bf16.mxu0 0
        %302 = vmatpush1.bf16.msra.mxu0 0
        %303 = vmatprep.subr.bf16.mxu0 0
        %304 = vmatpush1.bf16.msra.mxu0 0
        %305 = vmatprep.subr.bf16.mxu0 0
        %306 = vmatpush1.bf16.msra.mxu0 0
        %307 = vmatprep.subr.bf16.mxu0 0
        %308 = vmatpush1.bf16.msra.mxu0 0
        %309 = vmatprep.subr.bf16.mxu0 0
        %310 = vmatpush1.bf16.msra.mxu0 0
        %311 = vmatprep.subr.bf16.mxu0 0
        %312 = vmatpush1.bf16.msra.mxu0 0
        %313 = vmatprep.subr.bf16.mxu0 0
        %314 = vmatpush1.bf16.msra.mxu0 0
        %315 = vmatprep.subr.bf16.mxu0 0
        %316 = vmatpush1.bf16.msra.mxu0 %v207
        %317 = vmatprep.subr.bf16.mxu0 0
        %318 = vmatpush2.bf16.msra.mxu0 0
        %319 = vmatprep.subr.bf16.mxu0 0
        %320 = vmatpush2.bf16.msra.mxu0 0
        %321 = vmatprep.subr.bf16.mxu0 0
        %322 = vmatpush2.bf16.msra.mxu0 0
        %323 = vmatprep.subr.bf16.mxu0 0
        %324 = vmatpush2.bf16.msra.mxu0 0
        %325 = vmatprep.subr.bf16.mxu0 0
        %326 = vmatpush2.bf16.msra.mxu0 0
        %327 = vmatprep.subr.bf16.mxu0 0
        %328 = vmatpush2.bf16.msra.mxu0 0
        %329 = vmatprep.subr.bf16.mxu0 0
        %330 = vmatpush2.bf16.msra.mxu0 0
        %331 = vmatprep.subr.bf16.mxu0 0
        %332 = vmatpush2.bf16.msra.mxu0 0
        %333 = vmatprep.mubr.bf16.mxu0 0
        %334 = vmatmul.mubr.bf16.gmra.mxu0 %v299
        %v335 = vpop.f32.mrf.mxu0
        %v336 = vadd.f32 0.0, %v335
        %v337 = vpop.f32.mrf.mxu0
        %v338 = vpop.f32.mrf.mxu0
        %v339 = vadd.f32 0.0, %v338
        %v340 = vpop.f32.mrf.mxu0
        %341 = vdwg.mxu0
        %v342 = vadd.f32 %v292, %v336
        %v343 = vadd.f32 %v295, %v339
        %v344 = vpack.c.bf16 %v191, %v190
        %v345 = vunpack.c.l.bf16 %v344
        %v346 = vunpack.c.h.bf16 %v344
        %v347 = vsub.f32 %v190, %v345
        %v348 = vsub.f32 %v191, %v346
        %v349 = vpack.c.bf16 %v348, %v347
        %v350 = vunpack.c.l.bf16 %v349
        %v351 = vunpack.c.h.bf16 %v349
        %v352 = vsub.f32 %v347, %v350
        %v353 = vsub.f32 %v348, %v351
        %v354 = vpack.c.bf16 %v353, %v352
        %356 = vrot.lane.b32.xlu0 %v349, 112
        %v357 = vpop.permute.xlu0 %356
        %v359 = vsel %vm209, %v357, 0
        %361 = vmatprep.subr.bf16.mxu0 0
        %362 = vmatpush1.bf16.msra.mxu0 0
        %363 = vmatprep.subr.bf16.mxu0 0
        %364 = vmatpush1.bf16.msra.mxu0 0
        %365 = vmatprep.subr.bf16.mxu0 0
        %366 = vmatpush1.bf16.msra.mxu0 0
        %367 = vmatprep.subr.bf16.mxu0 0
        %368 = vmatpush1.bf16.msra.mxu0 0
        %369 = vmatprep.subr.bf16.mxu0 0
        %370 = vmatpush1.bf16.msra.mxu0 0
        %371 = vmatprep.subr.bf16.mxu0 0
        %372 = vmatpush1.bf16.msra.mxu0 0
        %373 = vmatprep.subr.bf16.mxu0 0
        %374 = vmatpush1.bf16.msra.mxu0 0
        %375 = vmatprep.subr.bf16.mxu0 0
        %376 = vmatpush1.bf16.msra.mxu0 %v207
        %377 = vmatprep.subr.bf16.mxu0 0
        %378 = vmatpush2.bf16.msra.mxu0 0
        %379 = vmatprep.subr.bf16.mxu0 0
        %380 = vmatpush2.bf16.msra.mxu0 0
        %381 = vmatprep.subr.bf16.mxu0 0
        %382 = vmatpush2.bf16.msra.mxu0 0
        %383 = vmatprep.subr.bf16.mxu0 0
        %384 = vmatpush2.bf16.msra.mxu0 0
        %385 = vmatprep.subr.bf16.mxu0 0
        %386 = vmatpush2.bf16.msra.mxu0 0
        %387 = vmatprep.subr.bf16.mxu0 0
        %388 = vmatpush2.bf16.msra.mxu0 0
        %389 = vmatprep.subr.bf16.mxu0 0
        %390 = vmatpush2.bf16.msra.mxu0 0
        %391 = vmatprep.subr.bf16.mxu0 0
        %392 = vmatpush2.bf16.msra.mxu0 0
        %393 = vmatprep.mubr.bf16.mxu0 0
        %394 = vmatmul.mubr.bf16.gmra.mxu0 %v359
        %v395 = vpop.f32.mrf.mxu0
        %v396 = vadd.f32 0.0, %v395
        %v397 = vpop.f32.mrf.mxu0
        %v398 = vpop.f32.mrf.mxu0
        %v399 = vadd.f32 0.0, %v398
        %v400 = vpop.f32.mrf.mxu0
        %401 = vdwg.mxu0
        %403 = vrot.lane.b32.xlu0 %v344, 112
        %v404 = vpop.permute.xlu0 %403
        %v406 = vsel %vm209, %v404, 0
        %408 = vmatprep.subr.bf16.mxu0 0
        %409 = vmatpush1.bf16.msra.mxu0 0
        %410 = vmatprep.subr.bf16.mxu0 0
        %411 = vmatpush1.bf16.msra.mxu0 0
        %412 = vmatprep.subr.bf16.mxu0 0
        %413 = vmatpush1.bf16.msra.mxu0 0
        %414 = vmatprep.subr.bf16.mxu0 0
        %415 = vmatpush1.bf16.msra.mxu0 0
        %416 = vmatprep.subr.bf16.mxu0 0
        %417 = vmatpush1.bf16.msra.mxu0 0
        %418 = vmatprep.subr.bf16.mxu0 0
        %419 = vmatpush1.bf16.msra.mxu0 0
        %420 = vmatprep.subr.bf16.mxu0 0
        %421 = vmatpush1.bf16.msra.mxu0 0
        %422 = vmatprep.subr.bf16.mxu0 0
        %423 = vmatpush1.bf16.msra.mxu0 %v207
        %424 = vmatprep.subr.bf16.mxu0 0
        %425 = vmatpush2.bf16.msra.mxu0 0
        %426 = vmatprep.subr.bf16.mxu0 0
        %427 = vmatpush2.bf16.msra.mxu0 0
        %428 = vmatprep.subr.bf16.mxu0 0
        %429 = vmatpush2.bf16.msra.mxu0 0
        %430 = vmatprep.subr.bf16.mxu0 0
        %431 = vmatpush2.bf16.msra.mxu0 0
        %432 = vmatprep.subr.bf16.mxu0 0
        %433 = vmatpush2.bf16.msra.mxu0 0
        %434 = vmatprep.subr.bf16.mxu0 0
        %435 = vmatpush2.bf16.msra.mxu0 0
        %436 = vmatprep.subr.bf16.mxu0 0
        %437 = vmatpush2.bf16.msra.mxu0 0
        %438 = vmatprep.subr.bf16.mxu0 0
        %439 = vmatpush2.bf16.msra.mxu0 0
        %440 = vmatprep.mubr.bf16.mxu0 0
        %441 = vmatmul.mubr.bf16.gmra.mxu0 %v406
        %v442 = vpop.f32.mrf.mxu0
        %v443 = vadd.f32 %v396, %v442
        %v444 = vpop.f32.mrf.mxu0
        %v445 = vpop.f32.mrf.mxu0
        %v446 = vadd.f32 %v399, %v445
        %v447 = vpop.f32.mrf.mxu0
        %448 = vdwg.mxu0
        %450 = vrot.lane.b32.xlu0 %v354, 112
        %v451 = vpop.permute.xlu0 %450
        %v453 = vsel %vm209, %v451, 0
        %455 = vmatprep.subr.bf16.mxu0 0
        %456 = vmatpush1.bf16.msra.mxu0 0
        %457 = vmatprep.subr.bf16.mxu0 0
        %458 = vmatpush1.bf16.msra.mxu0 0
        %459 = vmatprep.subr.bf16.mxu0 0
        %460 = vmatpush1.bf16.msra.mxu0 0
        %461 = vmatprep.subr.bf16.mxu0 0
        %462 = vmatpush1.bf16.msra.mxu0 0
        %463 = vmatprep.subr.bf16.mxu0 0
        %464 = vmatpush1.bf16.msra.mxu0 0
        %465 = vmatprep.subr.bf16.mxu0 0
        %466 = vmatpush1.bf16.msra.mxu0 0
        %467 = vmatprep.subr.bf16.mxu0 0
        %468 = vmatpush1.bf16.msra.mxu0 0
        %469 = vmatprep.subr.bf16.mxu0 0
        %470 = vmatpush1.bf16.msra.mxu0 %v207
        %471 = vmatprep.subr.bf16.mxu0 0
        %472 = vmatpush2.bf16.msra.mxu0 0
        %473 = vmatprep.subr.bf16.mxu0 0
        %474 = vmatpush2.bf16.msra.mxu0 0
        %475 = vmatprep.subr.bf16.mxu0 0
        %476 = vmatpush2.bf16.msra.mxu0 0
        %477 = vmatprep.subr.bf16.mxu0 0
        %478 = vmatpush2.bf16.msra.mxu0 0
        %479 = vmatprep.subr.bf16.mxu0 0
        %480 = vmatpush2.bf16.msra.mxu0 0
        %481 = vmatprep.subr.bf16.mxu0 0
        %482 = vmatpush2.bf16.msra.mxu0 0
        %483 = vmatprep.subr.bf16.mxu0 0
        %484 = vmatpush2.bf16.msra.mxu0 0
        %485 = vmatprep.subr.bf16.mxu0 0
        %486 = vmatpush2.bf16.msra.mxu0 0
        %487 = vmatprep.mubr.bf16.mxu0 0
        %488 = vmatmul.mubr.bf16.gmra.mxu0 %v453
        %v489 = vpop.f32.mrf.mxu0
        %v490 = vadd.f32 0.0, %v489
        %v491 = vpop.f32.mrf.mxu0
        %v492 = vpop.f32.mrf.mxu0
        %v493 = vadd.f32 0.0, %v492
        %v494 = vpop.f32.mrf.mxu0
        %495 = vdwg.mxu0
        %v496 = vadd.f32 %v443, %v490
        %v497 = vadd.f32 %v446, %v493
        %vm498 = vcmask 64512
        %499 = vst.msk [vmem:[%s157] sm:$0xff] %vm498, %v342
        %500 = vst.msk [vmem:[%s157 + $0x8] sm:$0xff] %vm498, %v343
        %503 = vrot.lane.b32.xlu0 %v342, 120
        %v504 = vpop.permute.xlu0 %503
        %505 = vrot.lane.b32.xlu0 %v343, 120
        %v506 = vpop.permute.xlu0 %505
        %s509 = scalar_lea.vmem %s157, 16 [#allocation2]
        %510 = vst.msk [vmem:[%s509] sm:$0xff] %vm498, %v504
        %511 = vst.msk [vmem:[%s509 + $0x8] sm:$0xff] %vm498, %v506
        %s512 = scalar_lea.vmem %s157, 32 [#allocation2]
        %513 = vst.msk [vmem:[%s512] sm:$0xff] %vm498, %v496
        %514 = vst.msk [vmem:[%s512 + $0x8] sm:$0xff] %vm498, %v497
        %517 = vrot.lane.b32.xlu0 %v496, 120
        %v518 = vpop.permute.xlu0 %517
        %519 = vrot.lane.b32.xlu0 %v497, 120
        %v520 = vpop.permute.xlu0 %519
        %s523 = scalar_lea.vmem %s157, 48 [#allocation2]
        %524 = vst.msk [vmem:[%s523] sm:$0xff] %vm498, %v518
        %525 = vst.msk [vmem:[%s523 + $0x8] sm:$0xff] %vm498, %v520
        %s526 = sand.u32 %s84, 1
        %s527 = sand.u32 %s84, 1
        %s528 = smul.addr %s527, 64
        %s529 = scalar_lea.vmem [#allocation2], %s528
        // Predicated region
        $region29: #{dwt_forward.1} parent=27 // pred_check
          %p530 = pneg %p94
        $region30: #{dwt_forward.1} parent=27 // pred_check_branch
          %532 = sbr.rel (%p530) target = $region32
        $region31: #{dwt_forward.1} parent=27 // pred_region
          %s533 = smul.u32 2, %s18
          %s534 = smul.addr %s17, 16
          %s535 = sadd.s32 %s533, %s534
          %s536 = smul.addr %s535, 8
          %s537 = scalar_lea.vmem %s2, %s536
          // Predicated region
          $region33: #{dwt_forward.1} parent=31 // pred_check
            _
          $region34: #{dwt_forward.1} parent=31 // pred_check_branch
            %539 = sbr.rel (0) target = $region36
          $region35: #{dwt_forward.1} parent=31 // pred_region
            // Predicated region
            $region37: #{dwt_forward.1} parent=35 // pred_check
              _
            $region38: #{dwt_forward.1} parent=35 // pred_check_branch
              %541 = sbr.rel (0) target = $region40
            $region39: #{dwt_forward.1} parent=35 // pred_region
              // Predicated region
              $region52: #{dwt_forward.1} parent=39 // pred_check
                _
              $region53: #{dwt_forward.1} parent=39 // pred_check_branch
                %571 = sbr.rel (0) target = $region55
              $region54: #{dwt_forward.1} parent=39 // pred_region
                loop: start=0, step=1, limit=1
                $region56: #{dwt_forward.1} parent=54 // loop_pre_header
                  _
                $region57: #{dwt_forward.1} parent=54 // loop_header
                  %s573 = sphi 0, %s577
                  %p574 = scmp.ge.s32.totalorder %s573, 1
                  %s578 = sphi %s529, %s529
                  %s579 = sphi %s537, %s537
                $region58: #{dwt_forward.1} parent=54 // loop_header_branch
                  %576 = sbr.rel (%p574) target = $region62
                $region59: #{dwt_forward.1} parent=54 // loop_body
                  %v580 = vld [vmem:[%s578] sm:$0xff]
                  %581 = vst [vmem:[%s579] sm:$0xff] %v580
                  %v582 = vld [vmem:[%s578 + $0x8] sm:$0xff]
                  %583 = vst [vmem:[%s579 + $0x8] sm:$0xff] %v582
                  %v584 = vld [vmem:[%s578 + $0x10] sm:$0xff]
                  %585 = vst [vmem:[%s579 + $0x20] sm:$0xff] %v584
                  %v586 = vld [vmem:[%s578 + $0x18] sm:$0xff]
                  %587 = vst [vmem:[%s579 + $0x28] sm:$0xff] %v586
                  %v588 = vld [vmem:[%s578 + $0x20] sm:$0xff]
                  %589 = vst [vmem:[%s579 + $0x40] sm:$0xff] %v588
                  %v590 = vld [vmem:[%s578 + $0x28] sm:$0xff]
                  %591 = vst [vmem:[%s579 + $0x48] sm:$0xff] %v590
                  %v592 = vld [vmem:[%s578 + $0x30] sm:$0xff]
                  %593 = vst [vmem:[%s579 + $0x60] sm:$0xff] %v592
                  %v594 = vld [vmem:[%s578 + $0x38] sm:$0xff]
                  %595 = vst [vmem:[%s579 + $0x68] sm:$0xff] %v594
                $region60: #{dwt_forward.1} parent=54 // loop_footer
                  %s577 = sadd.s32 1, %s573
                $region61: #{dwt_forward.1} parent=54 // loop_footer_branch
                  %572 = sbr.rel target = $region57
                $region62: #{dwt_forward.1} parent=54 // loop_exit
                  _
              $region55: #{dwt_forward.1} parent=39 // pred_fallthru
                _
              // Predicated region
              $region63: #{dwt_forward.1} parent=39 // pred_check
                _
              $region64: #{dwt_forward.1} parent=39 // pred_check_branch
                %597 = sbr.rel target = $region66
              $region65: #{dwt_forward.1} parent=39 // pred_region
                _
              $region66: #{dwt_forward.1} parent=39 // pred_fallthru
                _
            $region40: #{dwt_forward.1} parent=35 // pred_fallthru
              _
            // Predicated region
            $region41: #{dwt_forward.1} parent=35 // pred_check
              _
            $region42: #{dwt_forward.1} parent=35 // pred_check_branch
              %543 = sbr.rel target = $region44
            $region43: #{dwt_forward.1} parent=35 // pred_region
              %s545 = ssub.s32 256, 1
              loop: start=0, step=1, limit=1
              $region45: #{dwt_forward.1} parent=43 // loop_pre_header
                _
              $region46: #{dwt_forward.1} parent=43 // loop_header
                %s547 = sphi 0, %s551
                %p548 = scmp.ge.s32.totalorder %s547, 1
                %s552 = sphi %s529, %s529
                %s553 = sphi %s537, %s537
              $region47: #{dwt_forward.1} parent=43 // loop_header_branch
                %550 = sbr.rel (%p548) target = $region51
              $region48: #{dwt_forward.1} parent=43 // loop_body
                %v554 = vld [vmem:[%s552] sm:%s545]
                %555 = vst [vmem:[%s553] sm:%s545] %v554
                %v556 = vld [vmem:[%s552 + $0x8] sm:%s545]
                %557 = vst [vmem:[%s553 + $0x8] sm:%s545] %v556
                %v558 = vld [vmem:[%s552 + $0x10] sm:%s545]
                %559 = vst [vmem:[%s553 + $0x20] sm:%s545] %v558
                %v560 = vld [vmem:[%s552 + $0x18] sm:%s545]
                %561 = vst [vmem:[%s553 + $0x28] sm:%s545] %v560
                %v562 = vld [vmem:[%s552 + $0x20] sm:%s545]
                %563 = vst [vmem:[%s553 + $0x40] sm:%s545] %v562
                %v564 = vld [vmem:[%s552 + $0x28] sm:%s545]
                %565 = vst [vmem:[%s553 + $0x48] sm:%s545] %v564
                %v566 = vld [vmem:[%s552 + $0x30] sm:%s545]
                %567 = vst [vmem:[%s553 + $0x60] sm:%s545] %v566
                %v568 = vld [vmem:[%s552 + $0x38] sm:%s545]
                %569 = vst [vmem:[%s553 + $0x68] sm:%s545] %v568
              $region49: #{dwt_forward.1} parent=43 // loop_footer
                %s551 = sadd.s32 1, %s547
              $region50: #{dwt_forward.1} parent=43 // loop_footer_branch
                %546 = sbr.rel target = $region46
              $region51: #{dwt_forward.1} parent=43 // loop_exit
                _
            $region44: #{dwt_forward.1} parent=35 // pred_fallthru
              _
          $region36: #{dwt_forward.1} parent=31 // pred_fallthru
            _
          %598 = vnop
        $region32: #{dwt_forward.1} parent=27 // pred_fallthru
          _
      $region28: #{dwt_forward.1} parent=5 // pred_fallthru
        _
      %p599 = scmp.le.s32.totalorder 2, %s8
      // Predicated region
      $region67: #{dwt_forward.1} parent=5 // pred_check
        %p600 = pneg %p599
      $region68: #{dwt_forward.1} parent=5 // pred_check_branch
        %602 = sbr.rel (%p600) target = $region70
      $region69: #{dwt_forward.1} parent=5 // pred_region
        %s603 = ssub.s32 %s8, 2
        // Predicated region
        $region71: #{dwt_forward.1} parent=69 // pred_check
          %p604 = pneg %p100
        $region72: #{dwt_forward.1} parent=69 // pred_check_branch
          %606 = sbr.rel (%p604) target = $region74
        $region73: #{dwt_forward.1} parent=69 // pred_region
          %s607 = sand.u32 %s85, 1
          %s608 = sand.u32 %s85, 1
          %s609 = smul.addr %s608, 64
          %s610 = scalar_lea.vmem [#allocation2], %s609
        $region74: #{dwt_forward.1} parent=69 // pred_fallthru
          _
      $region70: #{dwt_forward.1} parent=5 // pred_fallthru
        _
    $region6: #{dwt_forward.1} parent=1 // loop_footer
      %s12 = sadd.s32 1, %s8
    $region7: #{dwt_forward.1} parent=1 // loop_footer_branch
      %7 = sbr.rel target = $region3
    $region8: #{dwt_forward.1} parent=1 // loop_exit
      _

</llo_original>
